<compile_context>
chip_gen: v6e
topology: v6e:2x2x1
jax: 0.10.0
libtpu: 0.0.40
codegen_flags: <defaults>
</compile_context>

<pallas_src>
import functools

import jax
import jax.numpy as jnp
from jax.experimental import pallas as pl
from jax.experimental.pallas import tpu as pltpu

LANE = 128


def _round_up(x, m):
    return (x + m - 1) // m * m


def _vmem_limit_bytes():
    """Generation-aware scoped-VMEM limit (~48 MiB on v7x, up to 96 MiB on v5e/v6e)."""
    cap = 64 * 1024 * 1024
    try:
        info = pltpu.get_tpu_info()
        cap = int(getattr(info, "vmem_capacity_bytes", cap) or cap)
    except Exception:
        pass
    return min(cap * 3 // 4, 96 * 1024 * 1024)


def _choose_row_tile(rows_raw, n_in_groups, elem_bytes, vmem_limit, batch):
    """Largest multiple-of-8 row tile whose double-buffered blocks fit the budget."""
    budget = int(vmem_limit * 0.6)          # headroom for Mosaic internal scratch
    # Per grid step the pipeline holds:
    #   2 x input block  (n_in_groups, row_tile, LANE)
    #   2 x output block (row_tile, LANE)
    per_row = LANE * elem_bytes * 2 * (n_in_groups + 1)
    cap = max(8, (budget // per_row) // 8 * 8)
    row_tile = min(_round_up(max(rows_raw, 1), 8), cap)
    # Keep at least 2 parallel grid steps so both v7x TensorCores get work.
    while batch * pl.cdiv(rows_raw, row_tile) < 2 and row_tile > 8:
        row_tile = max(8, ((row_tile // 2) + 7) // 8 * 8)
    return row_tile


# ---------------------------------------------------------------------------
# Pallas kernels (Stage 3)
# ---------------------------------------------------------------------------
def _weighted_sum_kernel(mask_ref, x_ref, out_ref, *, outchannel):
    """out[b, tile] = sum_k mask[b, k] * x[b, k, tile]   (soft / training mask)."""
    b = pl.program_id(0)
    acc = mask_ref[b, 0] * x_ref[0, 0]            # init with k=0 term: no zeros pass
    for k in range(1, outchannel):
        acc = acc + mask_ref[b, k] * x_ref[0, k]
    out_ref[0] = acc.astype(out_ref.dtype)


def _gather_kernel(idx_ref, x_ref, out_ref):
    """out[b, tile] = x[b, idx[b], tile]   (one-hot / inference mask)."""
    del idx_ref                                   # consumed by the index_map
    out_ref[0] = x_ref[0, 0]


# ---------------------------------------------------------------------------
# Wrapper
# ---------------------------------------------------------------------------
def gumble_block_2d_all(x, w1, b1, w2, b2, a1, a2, tau, outchannel, u, test_flag,
                        row_tile=None):
    """x: (B, C, H, W). Returns (input_conv, ch_mask_1) like the torch module."""
    B, C, H, W = x.shape
    assert C % outchannel == 0
    groups = C // outchannel
    flat = groups * H * W
    dtype = x.dtype
    elem_bytes = jnp.dtype(dtype).itemsize

    # ---- Stage 1+2: squeeze-excite / gumbel mask path (tiny, XLA-fused) ----
    pooled = jnp.mean(x.astype(jnp.float32), axis=(2, 3))              # (B, C)
    h = pooled @ w1.T + b1
    h = jnp.where(h >= 0, h, a1 * h)                                   # PReLU
    logits = h @ w2.T + b2
    logits = jnp.where(logits >= 0, logits, a2 * logits)               # PReLU
    s = jax.nn.softmax(logits, axis=1)
    # torch re-samples until no exact zeros; emulate by clamping u into (0, 1).
    u_safe = jnp.clip(u.astype(jnp.float32),
                      jnp.finfo(jnp.float32).tiny, 1.0 - 1e-7)
    gum = -jnp.log(-jnp.log(u_safe))
    mask = jax.nn.softmax((s + gum) / tau, axis=1)                     # (B, outC)

    if test_flag:
        idx = jnp.argmax(mask, axis=1).astype(jnp.int32)               # (B,)
        ch_mask = jax.nn.one_hot(idx, outchannel, dtype=jnp.float32)
    else:
        ch_mask = mask

    # ---- Stage 3: streaming kernel over a sublane-dense (rows, 128) layout ----
    vmem_limit = _vmem_limit_bytes()
    rows_raw = pl.cdiv(flat, LANE)
    n_in_groups = 1 if test_flag else outchannel
    if row_tile is None:
        row_tile = _choose_row_tile(rows_raw, n_in_groups, elem_bytes,
                                    vmem_limit, B)
    rows = _round_up(rows_raw, row_tile)
    n_t = rows // row_tile

    x3 = x.reshape(B, outchannel, flat)
    pad = rows * LANE - flat
    if pad:
        # TODO(synk): a masked partial last tile would avoid this HBM copy for
        # non-(8*128)-divisible feature maps; pad-and-slice keeps it simple.
        x3 = jnp.pad(x3, ((0, 0), (0, 0), (0, pad)))
    x4 = x3.reshape(B, outchannel, rows, LANE)

    cparams = pltpu.CompilerParams(
        dimension_semantics=("parallel", "parallel"),
        vmem_limit_bytes=vmem_limit)

    if test_flag:
        # One-hot mask: scalar-prefetch the argmax index and DMA only the
        # selected channel group (reads 1/outC of the data).
        out_pad = pl.pallas_call(
            _gather_kernel,
            out_shape=jax.ShapeDtypeStruct((B, rows, LANE), dtype),
            grid_spec=pltpu.PrefetchScalarGridSpec(
                num_scalar_prefetch=1,
                grid=(B, n_t),
                in_specs=[pl.BlockSpec((1, 1, row_tile, LANE),
                                       lambda b, t, idx: (b, idx[b], t, 0))],
                out_specs=pl.BlockSpec((1, row_tile, LANE),
                                       lambda b, t, idx: (b, t, 0))),
            compiler_params=cparams,
        )(idx, x4)
    else:
        out_pad = pl.pallas_call(
            functools.partial(_weighted_sum_kernel, outchannel=outchannel),
            out_shape=jax.ShapeDtypeStruct((B, rows, LANE), dtype),
            grid=(B, n_t),
            in_specs=[
                pl.BlockSpec(memory_space=pltpu.MemorySpace.SMEM),   # mask (B,outC)
                pl.BlockSpec((1, outchannel, row_tile, LANE),
                             lambda b, t: (b, 0, t, 0)),             # x4
            ],
            out_specs=pl.BlockSpec((1, row_tile, LANE), lambda b, t: (b, t, 0)),
            compiler_params=cparams,
        )(mask, x4)

    input_conv = out_pad.reshape(B, rows * LANE)[:, :flat].reshape(B, groups, H, W)
    ch_mask_1 = ch_mask.reshape(B, outchannel, 1, 1, 1)
    return input_conv, ch_mask_1


# ---------------------------------------------------------------------------
# Pure-JAX reference mirroring the PyTorch forward.
# ---------------------------------------------------------------------------
def reference(x, w1, b1, w2, b2, a1, a2, tau, outchannel, u, test_flag):
    B, C, H, W = x.shape
    groups = C // outchannel
    pooled = x.mean(axis=(2, 3))                            # (B, C)
    h = pooled @ w1.T + b1
    h = jnp.where(h >= 0, h, a1 * h)
    logits = h @ w2.T + b2
    logits = jnp.where(logits >= 0, logits, a2 * logits)    # (B, outC)
    s = jax.nn.softmax(logits, axis=1)
    u_safe = jnp.clip(u, jnp.finfo(jnp.float32).tiny, 1.0 - 1e-7)
    gum = -jnp.log(-jnp.log(u_safe))
    y = jax.nn.softmax((s + gum) / tau, axis=1)
    if test_flag:
        y = jax.nn.one_hot(jnp.argmax(y, axis=1), outchannel, dtype=jnp.float32)
    xr = x.reshape(B, outchannel, groups, H, W)
    out = jnp.sum(xr * y[:, :, None, None, None], axis=1)
    return out, y


if __name__ == "__main__":
    B, C = 2, 4
    outchannel = 2
    a1, a2, tau = 0.25, 0.25, 1.0   # nn.PReLU() default alpha; tau1 = 1

    key = jax.random.PRNGKey(0)
    k1, k2, k3, k4, k5, k6 = jax.random.split(key, 6)
    w1 = jax.random.normal(k2, (C, C), jnp.float32) * 0.1
    b1 = jax.random.normal(k3, (C,), jnp.float32) * 0.1
    w2 = jax.random.normal(k4, (outchannel, C), jnp.float32) * 0.1
    b2 = jax.random.normal(k5, (outchannel,), jnp.float32) * 0.1
    u = jax.random.uniform(k6, (B, outchannel), jnp.float32, minval=1e-6, maxval=1.0)

    configs = [
        (16, 16, None),   # default tile choice
        (32, 32, 8),      # explicit small tile -> multi-tile spatial grid
        (12, 12, None),   # non-128-divisible flat axis -> pad path
    ]
    for H, W, row_tile in configs:
        x = jax.random.normal(k1, (B, C, H, W), jnp.float32)
        for test_flag in (False, True):
            out, ch_mask = gumble_block_2d_all(x, w1, b1, w2, b2, a1, a2, tau,
                                               outchannel, u, test_flag,
                                               row_tile=row_tile)
            out = jax.block_until_ready(out)
            ch_mask = jax.block_until_ready(ch_mask)

            ref_out, ref_mask = reference(x, w1, b1, w2, b2, a1, a2, tau,
                                          outchannel, u, test_flag)
            assert out.shape == (B, C // outchannel, H, W)
            assert ch_mask.shape == (B, outchannel, 1, 1, 1)
            assert jnp.allclose(out, ref_out, atol=1e-4, rtol=1e-4)
            assert jnp.allclose(ch_mask.reshape(B, outchannel), ref_mask, atol=1e-5)

    print("KERNEL_OK")
</pallas_src>

<mosaic_0001>
module attributes {stable_mosaic.version = 11 : i64} {
  func.func @_weighted_sum_kernel(%arg0: i32, %arg1: i32, %arg2: memref<2x2xf32, #tpu.memory_space<smem>>, %arg3: memref<1x2x8x128xf32, #tpu.memory_space<vmem>>, %arg4: memref<1x8x128xf32, #tpu.memory_space<vmem>>) attributes {dimension_semantics = [#tpu.dimension_semantics<parallel>, #tpu.dimension_semantics<parallel>], iteration_bounds = array<i64: 2, 1>, scalar_prefetch = 0 : i64, scratch_operands = 0 : i64, tpu.core_type = #tpu.core_type<tc>, window_params = [{transform_indices = @transform_0, window_bounds = array<i64: 2, 2>}, {transform_indices = @transform_1, window_bounds = array<i64: 1, 2, 8, 128>}, {transform_indices = @transform_2, window_bounds = array<i64: 1, 8, 128>}]} {
    %0 = arith.index_cast %arg0 : i32 to index
    %c0 = arith.constant 0 : index
    %1 = memref.load %arg2[%0, %c0] : memref<2x2xf32, #tpu.memory_space<smem>>
    %c0_0 = arith.constant 0 : index
    %c0_1 = arith.constant 0 : index
    %c0_2 = arith.constant 0 : index
    %c0_3 = arith.constant 0 : index
    %2 = vector.load %arg3[%c0_0, %c0_1, %c0_2, %c0_3] : memref<1x2x8x128xf32, #tpu.memory_space<vmem>>, vector<1x1x8x128xf32>
    %3 = vector.shape_cast %2 : vector<1x1x8x128xf32> to vector<8x128xf32>
    %4 = vector.broadcast %1 : f32 to vector<8x128xf32>
    %5 = arith.mulf %4, %3 : vector<8x128xf32>
    %6 = arith.index_cast %arg0 : i32 to index
    %c1 = arith.constant 1 : index
    %7 = memref.load %arg2[%6, %c1] : memref<2x2xf32, #tpu.memory_space<smem>>
    %c0_4 = arith.constant 0 : index
    %c1_5 = arith.constant 1 : index
    %c0_6 = arith.constant 0 : index
    %c0_7 = arith.constant 0 : index
    %8 = vector.load %arg3[%c0_4, %c1_5, %c0_6, %c0_7] : memref<1x2x8x128xf32, #tpu.memory_space<vmem>>, vector<1x1x8x128xf32>
    %9 = vector.shape_cast %8 : vector<1x1x8x128xf32> to vector<8x128xf32>
    %10 = vector.broadcast %7 : f32 to vector<8x128xf32>
    %11 = arith.mulf %10, %9 : vector<8x128xf32>
    %12 = arith.addf %5, %11 : vector<8x128xf32>
    %c0_8 = arith.constant 0 : index
    %c0_9 = arith.constant 0 : index
    %c0_10 = arith.constant 0 : index
    %13 = vector.load %arg4[%c0_8, %c0_9, %c0_10] : memref<1x8x128xf32, #tpu.memory_space<vmem>>, vector<1x8x128xf32>
    %14 = vector.shape_cast %13 : vector<1x8x128xf32> to vector<8x128xf32>
    %15 = vector.shape_cast %12 : vector<8x128xf32> to vector<1x8x128xf32>
    tpu.vector_store %arg4[%c0_8, %c0_9, %c0_10], %15 {strides = array<i32>} : memref<1x8x128xf32, #tpu.memory_space<vmem>>, vector<1x8x128xf32>,
    return
  }
  func.func @transform_0(%arg0: i32, %arg1: i32) -> (i32, i32) {
    %c0_i32 = arith.constant 0 : i32
    %c0_i32_0 = arith.constant 0 : i32
    %c0_i32_1 = arith.constant 0 : i32
    return %c0_i32, %c0_i32_0 : i32, i32
  }
  func.func @transform_1(%arg0: i32, %arg1: i32) -> (i32, i32, i32, i32) {
    %c0_i32 = arith.constant 0 : i32
    %c0_i32_0 = arith.constant 0 : i32
    %c0_i32_1 = arith.constant 0 : i32
    return %arg0, %c0_i32, %arg1, %c0_i32_0 : i32, i32, i32, i32
  }
  func.func @transform_2(%arg0: i32, %arg1: i32) -> (i32, i32, i32) {
    %c0_i32 = arith.constant 0 : i32
    %c0_i32_0 = arith.constant 0 : i32
    return %arg0, %arg1, %c0_i32 : i32, i32, i32
  }
}

</mosaic_0001>

<llo_original>
// kernel: tpu_custom_call.1
$region0: #{tpu_custom_call.1}
  #allocation0 [shape = 'u32[]', space=smem, size = 0x4, offset = 0x4, fixed_abs, tag = 'smem constant byte address 0x4 - core index']
  #allocation1 [shape = 'u32[144,128]{1,0:T(1,128)}', space=vmem, size = 0x12000, scoped, tag = 'internal scratch']
  %s0 = inlined_call_operand.hbm [shape: f32[2,2], index: 0, kind: input, shape index: {}]
  %s1 = inlined_call_operand.hbm [shape: f32[2,2,8,128], index: 1, kind: input, shape index: {}]
  %s2 = inlined_call_operand.hbm [shape: f32[2,8,128], index: 2, kind: output, shape index: {}]
  %s3 = sld [smem:[#allocation0]]
  $region49: #{tpu_custom_call.1} parent=0
    _
  %s5 = ssub.s32 1, %s3
  %s6 = scalar_select 0, %s5, %s3
  $region1: #{tpu_custom_call.1} parent=0
    #allocation2 [shape = 'u8[1024]{0}', space=smem, size = 0x400, scoped, tag = 'input window, operand 0, single buffered']
    #allocation3 [shape = 's32[2]{0}', space=sflag, size = 0x8, scoped, tag = 'scoped memory for tpu_custom_call.1']
    #allocation4 [shape = 's32[2]{0}', space=sflag, size = 0x8, scoped, tag = 'scoped memory for tpu_custom_call.1']
    #allocation5 [shape = 's32[2]{0}', space=sflag, size = 0x8, scoped, tag = 'scoped memory for tpu_custom_call.1']
    #allocation6 [shape = 'u8[16384]{0}', space=vmem, size = 0x4000, scoped, tag = 'input window, operand 1']
    #allocation7 [shape = 'u8[8192]{0}', space=vmem, size = 0x2000, scoped, tag = 'output window, operand 0']
    %7 = vsyncpa [#allocation5], 0
    %8 = vsyncpa [#allocation3], 0
    %s9 = scalar_lea.sflag [#allocation3], 1
    %10 = vsyncpa %s9, 0
    %11 = vsyncpa [#allocation4], 0
    %s12 = scalar_lea.sflag [#allocation4], 1
    %13 = vsyncpa %s12, 0
    loop: start=0, step=1, limit=4
    $region2: #{tpu_custom_call.1} parent=1 // loop_pre_header
      _
    $region3: #{tpu_custom_call.1} parent=1 // loop_header
      %s15 = sphi 0, %s19
      %p16 = scmp.ge.s32.totalorder %s15, 4
      %s22 = sphi 0, %s34
      %s23 = sphi 0, %s30
      %s24 = sphi 0, %s22
      %s25 = sphi 0, %s23
      %s26 = sphi 0, %s24
      %s27 = sphi 0, %s25
      %s35 = sphi 0, %s35
      %s37 = sphi 0, %s35
      %s38 = sphi 0, %s37
      %s52 = sphi 0, %s38
      %s60 = sphi 0, %s62
      %s63 = sphi 0, %s60
      %s64 = sphi 0, %s63
      %s80 = sphi 0, %s64
      %s88 = sphi 0, %s90
      %s91 = sphi 0, %s88
      %s92 = sphi 0, %s91
      %s108 = sphi 0, %s92
    $region4: #{tpu_custom_call.1} parent=1 // loop_header_branch
      %18 = sbr.rel (%p16) target = $region8
    $region5: #{tpu_custom_call.1} parent=1 // loop_body
      %s20 = ssub.s32 %s15, 1
      %s21 = ssub.s32 %s15, 2
      %s28 = sadd.s32 1, %s23
      %p29 = scmp.ge.s32.totalorder %s28, 1
      %s30 = scalar_select %p29, 0, %s28
      %s31 = sadd.s32 1, %s22
      %s32 = scalar_select %p29, %s31, %s22
      %p33 = scmp.ge.s32.totalorder %s32, 2
      %s34 = scalar_select %p33, 0, %s32
      %s36 = sadd.s32 %s35, 1
      %p39 = scmp.eq.s32.totalorder %s15, 1
      %p40 = scmp.ne.s32.totalorder %s35, %s37
      %p41 = scmp.eq.s32.totalorder %s15, 0
      %p42 = por %p40, %p41
      %p43 = scmp.ne.s32.totalorder %s35, %s37
      %p44 = scmp.eq.s32.totalorder %s20, 1
      %p45 = por %p43, %p44
      %p46 = scmp.ne.s32.totalorder %s37, %s38
      %p47 = scmp.eq.s32.totalorder %s20, 0
      %p48 = por %p46, %p47
      %p49 = scmp.ne.s32.totalorder %s37, %s38
      %p50 = scmp.eq.s32.totalorder %s21, 1
      %p51 = por %p49, %p50
      %p53 = scmp.ne.s32.totalorder %s38, %s52
      %p54 = scmp.eq.s32.totalorder %s21, 0
      %p55 = por %p53, %p54
      %s56 = ssub.s32 %s22, %s34
      %s57 = ssub.s32 %s23, %s30
      %s58 = sor.u32 %s56, %s57
      %p59 = scmp.eq.s32.totalorder %s58, 0
      %s61 = sadd.s32 %s60, 1
      %s62 = scalar_select %p59, %s60, %s61
      %p65 = pneg %p59
      %p66 = scmp.eq.s32.totalorder %s15, 1
      %p67 = por %p65, %p66
      %p68 = scmp.ne.s32.totalorder %s60, %s63
      %p69 = scmp.eq.s32.totalorder %s15, 0
      %p70 = por %p68, %p69
      %p71 = scmp.ne.s32.totalorder %s60, %s63
      %p72 = scmp.eq.s32.totalorder %s20, 1
      %p73 = por %p71, %p72
      %p74 = scmp.ne.s32.totalorder %s63, %s64
      %p75 = scmp.eq.s32.totalorder %s20, 0
      %p76 = por %p74, %p75
      %p77 = scmp.ne.s32.totalorder %s63, %s64
      %p78 = scmp.eq.s32.totalorder %s21, 1
      %p79 = por %p77, %p78
      %p81 = scmp.ne.s32.totalorder %s64, %s80
      %p82 = scmp.eq.s32.totalorder %s21, 0
      %p83 = por %p81, %p82
      %s84 = ssub.s32 %s22, %s34
      %s85 = ssub.s32 %s23, %s30
      %s86 = sor.u32 %s84, %s85
      %p87 = scmp.eq.s32.totalorder %s86, 0
      %s89 = sadd.s32 %s88, 1
      %s90 = scalar_select %p87, %s88, %s89
      %p93 = pneg %p87
      %p94 = scmp.eq.s32.totalorder %s15, 1
      %p95 = por %p93, %p94
      %p96 = scmp.ne.s32.totalorder %s88, %s91
      %p97 = scmp.eq.s32.totalorder %s15, 0
      %p98 = por %p96, %p97
      %p99 = scmp.ne.s32.totalorder %s88, %s91
      %p100 = scmp.eq.s32.totalorder %s20, 1
      %p101 = por %p99, %p100
      %p102 = scmp.ne.s32.totalorder %s91, %s92
      %p103 = scmp.eq.s32.totalorder %s20, 0
      %p104 = por %p102, %p103
      %p105 = scmp.ne.s32.totalorder %s91, %s92
      %p106 = scmp.eq.s32.totalorder %s21, 1
      %p107 = por %p105, %p106
      %p109 = scmp.ne.s32.totalorder %s92, %s108
      %p110 = scmp.eq.s32.totalorder %s21, 0
      %p111 = por %p109, %p110
      %p112 = scmp.le.s32.totalorder 1, %s15
      %p113 = scmp.lt.s32.totalorder %s15, 3
      %p114 = pnand %p112, %p113
      %p115 = pneg %p114
      // Predicated region
      $region9: #{tpu_custom_call.1} parent=5 // pred_check
        _
      $region10: #{tpu_custom_call.1} parent=5 // pred_check_branch
        %117 = sbr.rel (%p114) target = $region12
      $region11: #{tpu_custom_call.1} parent=5 // pred_region
        %s118 = ssub.s32 %s15, 1
        // Predicated region
        $region13: #{tpu_custom_call.1} parent=11 // pred_check
          %p119 = pneg %p48
        $region14: #{tpu_custom_call.1} parent=11 // pred_check_branch
          %121 = sbr.rel (%p119) target = $region16
        $region15: #{tpu_custom_call.1} parent=11 // pred_region
          %s123 = ssub.s32 32, 32
          %124 = vsyncadd [#allocation5], %s123
          %127 = dma.hbm_to_smem %s0, 32, [#allocation2], [#allocation5]
        $region16: #{tpu_custom_call.1} parent=11 // pred_fallthru
          _
      $region12: #{tpu_custom_call.1} parent=5 // pred_fallthru
        _
      %p128 = scmp.lt.s32.totalorder %s15, 2
      // Predicated region
      $region17: #{tpu_custom_call.1} parent=5 // pred_check
        %p129 = pneg %p128
      $region18: #{tpu_custom_call.1} parent=5 // pred_check_branch
        %131 = sbr.rel (%p129) target = $region20
      $region19: #{tpu_custom_call.1} parent=5 // pred_region
        // Predicated region
        $region21: #{tpu_custom_call.1} parent=19 // pred_check
          %p132 = pneg %p70
        $region22: #{tpu_custom_call.1} parent=19 // pred_check_branch
          %134 = sbr.rel (%p132) target = $region24
        $region23: #{tpu_custom_call.1} parent=19 // pred_region
          %s135 = sand.u32 %s60, 1
          %s136 = scalar_lea.sflag [#allocation3], %s135
          %s137 = sand.u32 %s60, 1
          %s138 = smul.addr %s137, 16
          %s139 = scalar_lea.vmem [#allocation6], %s138
          %s141 = ssub.s32 256, 256
          %142 = vsyncadd %s136, %s141
          %s143 = smul.addr %s22, 2
          %s144 = sadd.s32 %s23, %s143
          %s145 = smul.addr %s144, 128
          %s146 = scalar_lea.hbm %s1, %s145
          %s147 = sshll.u32 %s139, 4
          %s148 = int_to_ptr.vmem [resolvable:$true] %s147
          %153 = dma.hbm_to_vmem [thread:$0]  %s146, 256, %s148, %s136, 128, 128, 8
        $region24: #{tpu_custom_call.1} parent=19 // pred_fallthru
          _
      $region20: #{tpu_custom_call.1} parent=5 // pred_fallthru
        _
      %p154 = scmp.le.s32.totalorder 1, %s15
      %p155 = scmp.lt.s32.totalorder %s15, 3
      %p156 = pnand %p154, %p155
      %p157 = pneg %p156
      // Predicated region
      $region25: #{tpu_custom_call.1} parent=5 // pred_check
        _
      $region26: #{tpu_custom_call.1} parent=5 // pred_check_branch
        %159 = sbr.rel (%p156) target = $region28
      $region27: #{tpu_custom_call.1} parent=5 // pred_region
        %s160 = ssub.s32 %s15, 1
        // Predicated region
        $region29: #{tpu_custom_call.1} parent=27 // pred_check
          %p161 = pneg %p48
        $region30: #{tpu_custom_call.1} parent=27 // pred_check_branch
          %163 = sbr.rel (%p161) target = $region32
        $region31: #{tpu_custom_call.1} parent=27 // pred_region
          %164 = dma.done [#allocation5], 32
        $region32: #{tpu_custom_call.1} parent=27 // pred_fallthru
          _
        %s165 = sand.u32 %s63, 1
        %s166 = scalar_lea.sflag [#allocation3], %s165
        %s167 = sand.u32 %s63, 1
        %s168 = smul.addr %s167, 16
        %s169 = scalar_lea.vmem [#allocation6], %s168
        // Predicated region
        $region33: #{tpu_custom_call.1} parent=27 // pred_check
          %p170 = pneg %p76
        $region34: #{tpu_custom_call.1} parent=27 // pred_check_branch
          %172 = sbr.rel (%p170) target = $region36
        $region35: #{tpu_custom_call.1} parent=27 // pred_region
          %173 = dma.done %s166, 256
        $region36: #{tpu_custom_call.1} parent=27 // pred_fallthru
          _
        %174 = sfence
        %p175 = pneg %p48
        %p176 = pneg %p45
        %s177 = sand.u32 %s63, 1
        %s178 = scalar_lea.sflag [#allocation3], %s177
        %s179 = sand.u32 %s63, 1
        %s180 = smul.addr %s179, 16
        %s181 = scalar_lea.vmem [#allocation6], %s180
        %p182 = pneg %p76
        %p183 = pneg %p73
        %p184 = pneg %p104
        %p185 = pneg %p101
        %s186 = sand.u32 %s91, 1
        %s187 = scalar_lea.sflag [#allocation4], %s186
        %s188 = sand.u32 %s91, 1
        %s189 = smul.addr %s188, 8
        %s190 = scalar_lea.vmem [#allocation7], %s189
        %s191 = smul.u32 %s24, 128
        %s192 = sld [smem:[#allocation2 + %s191]]
        %v193 = vld [vmem:[%s169] sm:$0xff]
        %v194 = vstv %s192
        %v195 = vmul.f32 %v194, %v193
        %s196 = sadd.s32 %s191, 1
        %s197 = sld [smem:[#allocation2 + %s196]]
        %s198 = scalar_lea.vmem %s169, 8 [#allocation6]
        %v199 = vld [vmem:[%s198] sm:$0xff]
        %v200 = vstv %s197
        %v201 = vmul.f32 %v200, %v199
        %v202 = vadd.f32 %v195, %v201
        %203 = vst [vmem:[%s190] sm:$0xff] %v202
        %s204 = sand.u32 %s91, 1
        %s205 = scalar_lea.sflag [#allocation4], %s204
        %s206 = sand.u32 %s91, 1
        %s207 = smul.addr %s206, 8
        %s208 = scalar_lea.vmem [#allocation7], %s207
        // Predicated region
        $region37: #{tpu_custom_call.1} parent=27 // pred_check
          %p209 = pneg %p101
        $region38: #{tpu_custom_call.1} parent=27 // pred_check_branch
          %211 = sbr.rel (%p209) target = $region40
        $region39: #{tpu_custom_call.1} parent=27 // pred_region
          %s213 = ssub.s32 128, 128
          %214 = vsyncadd %s205, %s213
          %s215 = sadd.s32 %s25, %s24
          %s216 = smul.addr %s215, 128
          %s217 = scalar_lea.hbm %s2, %s216
          %s219 = sshll.u32 %s208, 4
          %s220 = int_to_ptr.vmem [resolvable:$true] %s219
          %222 = dma.vmem_to_hbm [thread:$0]  %s220, 128, %s217, %s205
        $region40: #{tpu_custom_call.1} parent=27 // pred_fallthru
          _
      $region28: #{tpu_custom_call.1} parent=5 // pred_fallthru
        _
      %p223 = scmp.le.s32.totalorder 2, %s15
      // Predicated region
      $region41: #{tpu_custom_call.1} parent=5 // pred_check
        %p224 = pneg %p223
      $region42: #{tpu_custom_call.1} parent=5 // pred_check_branch
        %226 = sbr.rel (%p224) target = $region44
      $region43: #{tpu_custom_call.1} parent=5 // pred_region
        %s227 = ssub.s32 %s15, 2
        // Predicated region
        $region45: #{tpu_custom_call.1} parent=43 // pred_check
          %p228 = pneg %p107
        $region46: #{tpu_custom_call.1} parent=43 // pred_check_branch
          %230 = sbr.rel (%p228) target = $region48
        $region47: #{tpu_custom_call.1} parent=43 // pred_region
          %s231 = sand.u32 %s92, 1
          %s232 = scalar_lea.sflag [#allocation4], %s231
          %s233 = sand.u32 %s92, 1
          %s234 = smul.addr %s233, 8
          %s235 = scalar_lea.vmem [#allocation7], %s234
          %236 = dma.done %s232, 128
        $region48: #{tpu_custom_call.1} parent=43 // pred_fallthru
          _
      $region44: #{tpu_custom_call.1} parent=5 // pred_fallthru
        _
    $region6: #{tpu_custom_call.1} parent=1 // loop_footer
      %s19 = sadd.s32 1, %s15
    $region7: #{tpu_custom_call.1} parent=1 // loop_footer_branch
      %14 = sbr.rel target = $region3
    $region8: #{tpu_custom_call.1} parent=1 // loop_exit
      _
    %237 = vsyncpa [#allocation3], 1
    %s238 = scalar_lea.sflag [#allocation3], 1
    %239 = vsyncpa %s238, 1
    %240 = vsyncpa [#allocation4], 1
    %s241 = scalar_lea.sflag [#allocation4], 1
    %242 = vsyncpa %s241, 1
    %243 = vsyncpa [#allocation5], 1
    %s244 = scalar_lea.sflag [#allocation5], 1
    %245 = vsyncpa %s244, 1

</llo_original>
